<compile_context>
chip_gen: v7x
topology: tpu7x:2x2x1
jax: 0.10.0
libtpu: 0.0.40
codegen_flags: <defaults>
</compile_context>

<pallas_src>
import jax
import jax.numpy as jnp
from jax.experimental import pallas as pl
from jax.experimental.pallas import tpu as pltpu


def _soft_ce_kernel(lens_ref, x_ref, t_ref, o_ref):
    b = pl.program_id(0)
    si = pl.program_id(1)

    x = x_ref[0].astype(jnp.float32)   # (tS, V)
    t = t_ref[0].astype(jnp.float32)   # (tS, V)

    # Fused log-softmax cross-entropy:
    #   sum_v -t * (z - lse) = lse * sum_v t - sum_v t*z,   z = x - max_v x
    m = jnp.max(x, axis=-1, keepdims=True)                  # (tS, 1)
    z = x - m
    s_exp = jnp.sum(jnp.exp(z), axis=-1, keepdims=True)     # (tS, 1)
    s_t = jnp.sum(t, axis=-1, keepdims=True)                # (tS, 1)
    s_tz = jnp.sum(t * z, axis=-1, keepdims=True)           # (tS, 1)
    row_loss = jnp.log(s_exp) * s_t - s_tz                  # (tS, 1)

    # Mask rows at/beyond this batch element's length (also covers S padding,
    # since padded rows have global position >= S >= target_lens[b]).
    tile_s = x.shape[0]
    length = lens_ref[b]
    pos = si * tile_s + jax.lax.broadcasted_iota(jnp.int32, (tile_s, 1), 0)
    row_loss = jnp.where(pos < length, row_loss, 0.0)

    partial = jnp.sum(row_loss)
    o_ref[0, 0] = jnp.full((8, 128), partial, dtype=o_ref.dtype)


def _round_up(x, m):
    return (x + m - 1) // m * m


def _choose_tile_s(s, v, itemsize):
    # Budget: 2 inputs x 2 pipeline buffers of (tS, V) in the input dtype plus
    # ~3 f32-sized (tS, V) temporaries for the fused math.
    per_row_bytes = v * (4 * itemsize + 3 * 4)
    budget_bytes = 24 * 1024 * 1024
    ts = max(8, (budget_bytes // per_row_bytes) // 8 * 8)
    return int(min(ts, _round_up(s, 8)))


def soft_cross_entropy(inputs, target, target_lens, *, tile_s=None):
    """inputs, target: (B, S, V); target_lens: (B,) int. Returns scalar f32 loss."""
    assert inputs.shape == target.shape
    assert inputs.shape[0] == target_lens.shape[0]
    B, S, V = inputs.shape
    target_lens = target_lens.astype(jnp.int32)

    if tile_s is None:
        tile_s = _choose_tile_s(S, V, jnp.dtype(inputs.dtype).itemsize)
    tile_s = max(8, (tile_s // 8) * 8)
    tile_s = min(tile_s, _round_up(S, 8))
    s_pad = _round_up(S, tile_s)
    n_s = s_pad // tile_s

    if s_pad != S:
        pad = ((0, 0), (0, s_pad - S), (0, 0))
        inputs = jnp.pad(inputs, pad)   # zero padding is NaN-safe and masked out
        target = jnp.pad(target, pad)

    partials = pl.pallas_call(
        _soft_ce_kernel,
        out_shape=jax.ShapeDtypeStruct((B, n_s, 8, 128), jnp.float32),
        grid_spec=pltpu.PrefetchScalarGridSpec(
            num_scalar_prefetch=1,
            grid=(B, n_s),
            in_specs=[
                pl.BlockSpec((1, tile_s, V), lambda b, si, lens: (b, si, 0)),
                pl.BlockSpec((1, tile_s, V), lambda b, si, lens: (b, si, 0)),
            ],
            out_specs=pl.BlockSpec((1, 1, 8, 128),
                                   lambda b, si, lens: (b, si, 0, 0)),
        ),
        compiler_params=pltpu.CompilerParams(
            dimension_semantics=("parallel", "parallel"),
            vmem_limit_bytes=48 * 1024 * 1024,
        ),
    )(target_lens, inputs, target)

    per_batch = jnp.sum(partials[:, :, 0, 0], axis=1)   # (B,)
    lens_f = target_lens.astype(jnp.float32)
    # NOTE: same divide-by-zero hazard as the PyTorch reference if a length is 0.
    return jnp.mean(per_batch / (lens_f * lens_f))


def _reference(inputs, target, target_lens):
    mask = jnp.arange(target.shape[1])[None, :] < target_lens[:, None]
    target = target.astype(jnp.float32) * mask[:, :, None]
    logp = jax.nn.log_softmax(inputs.astype(jnp.float32), axis=-1)
    per_batch = jnp.sum(-target * logp, axis=(-1, -2))
    return jnp.mean(per_batch / target_lens.astype(jnp.float32) ** 2)


if __name__ == "__main__":
    key = jax.random.PRNGKey(0)
    k1, k2, k3, k4 = jax.random.split(key, 4)

    # Test 1: single tile, no padding.
    B, S, V = 2, 8, 32
    inputs = jax.random.normal(k1, (B, S, V), dtype=jnp.float32)
    target = jax.nn.softmax(jax.random.normal(k2, (B, S, V), dtype=jnp.float32), axis=-1)
    target_lens = jnp.array([5, 8], dtype=jnp.int32)

    loss = soft_cross_entropy(inputs, target, target_lens)
    jax.block_until_ready(loss)
    ref = _reference(inputs, target, target_lens)
    assert jnp.allclose(loss, ref, rtol=1e-5, atol=1e-5), (loss, ref)

    # Test 2: multi-tile S with padding (tile_s=8, S=20 -> S_pad=24, 3 tiles).
    B2, S2, V2 = 2, 20, 64
    inputs2 = jax.random.normal(k3, (B2, S2, V2), dtype=jnp.float32)
    target2 = jax.nn.softmax(jax.random.normal(k4, (B2, S2, V2), dtype=jnp.float32), axis=-1)
    target_lens2 = jnp.array([13, 20], dtype=jnp.int32)

    loss2 = soft_cross_entropy(inputs2, target2, target_lens2, tile_s=8)
    jax.block_until_ready(loss2)
    ref2 = _reference(inputs2, target2, target_lens2)
    assert jnp.allclose(loss2, ref2, rtol=1e-5, atol=1e-5), (loss2, ref2)

    print("KERNEL_OK")
</pallas_src>

<mosaic_0001>
module attributes {stable_mosaic.version = 11 : i64} {
  func.func @_soft_ce_kernel(%arg0: i32, %arg1: i32, %arg2: memref<2xi32, #tpu.memory_space<smem>>, %arg3: memref<1x8x32xf32, #tpu.memory_space<vmem>>, %arg4: memref<1x8x32xf32, #tpu.memory_space<vmem>>, %arg5: memref<1x1x8x128xf32, #tpu.memory_space<vmem>>) attributes {dimension_semantics = [#tpu.dimension_semantics<parallel>, #tpu.dimension_semantics<parallel>], iteration_bounds = array<i64: 2, 1>, scalar_prefetch = 1 : i64, scratch_operands = 0 : i64, tpu.core_type = #tpu.core_type<tc>, window_params = [{transform_indices = @transform_0, window_bounds = array<i64: 1, 8, 32>}, {transform_indices = @transform_1, window_bounds = array<i64: 1, 8, 32>}, {transform_indices = @transform_2, window_bounds = array<i64: 1, 1, 8, 128>}]} {
    %c0 = arith.constant 0 : index
    %c0_0 = arith.constant 0 : index
    %c0_1 = arith.constant 0 : index
    %0 = vector.load %arg3[%c0, %c0_0, %c0_1] : memref<1x8x32xf32, #tpu.memory_space<vmem>>, vector<1x8x32xf32>
    %1 = vector.shape_cast %0 : vector<1x8x32xf32> to vector<8x32xf32>
    %c0_2 = arith.constant 0 : index
    %c0_3 = arith.constant 0 : index
    %c0_4 = arith.constant 0 : index
    %2 = vector.load %arg4[%c0_2, %c0_3, %c0_4] : memref<1x8x32xf32, #tpu.memory_space<vmem>>, vector<1x8x32xf32>
    %3 = vector.shape_cast %2 : vector<1x8x32xf32> to vector<8x32xf32>
    %cst = arith.constant dense<0xFF800000> : vector<8xf32>
    %4 = vector.multi_reduction <maximumf>, %1, %cst [1] : vector<8x32xf32> to vector<8xf32>
    %5 = vector.shape_cast %4 : vector<8xf32> to vector<8x1xf32>
    %6 = vector.broadcast %5 : vector<8x1xf32> to vector<8x32xf32>
    %7 = arith.subf %1, %6 : vector<8x32xf32>
    %8 = math.exp %7 : vector<8x32xf32>
    %cst_5 = arith.constant dense<0.000000e+00> : vector<8xf32>
    %9 = vector.multi_reduction <add>, %8, %cst_5 [1] : vector<8x32xf32> to vector<8xf32>
    %10 = vector.shape_cast %9 : vector<8xf32> to vector<8x1xf32>
    %cst_6 = arith.constant dense<0.000000e+00> : vector<8xf32>
    %11 = vector.multi_reduction <add>, %3, %cst_6 [1] : vector<8x32xf32> to vector<8xf32>
    %12 = vector.shape_cast %11 : vector<8xf32> to vector<8x1xf32>
    %13 = arith.mulf %3, %7 : vector<8x32xf32>
    %cst_7 = arith.constant dense<0.000000e+00> : vector<8xf32>
    %14 = vector.multi_reduction <add>, %13, %cst_7 [1] : vector<8x32xf32> to vector<8xf32>
    %15 = vector.shape_cast %14 : vector<8xf32> to vector<8x1xf32>
    %16 = math.log %10 : vector<8x1xf32>
    %17 = arith.mulf %16, %12 : vector<8x1xf32>
    %18 = arith.subf %17, %15 : vector<8x1xf32>
    %19 = arith.index_cast %arg0 : i32 to index
    %20 = memref.load %arg2[%19] : memref<2xi32, #tpu.memory_space<smem>>
    %c8_i32 = arith.constant 8 : i32
    %21 = arith.muli %arg1, %c8_i32 : i32
    %22 = tpu.iota {dimensions = array<i32: 0>} : vector<8x1xi32>
    %23 = vector.broadcast %21 : i32 to vector<8x1xi32>
    %24 = arith.addi %23, %22 : vector<8x1xi32>
    %25 = vector.broadcast %20 : i32 to vector<8x1xi32>
    %26 = arith.cmpi slt, %24, %25 : vector<8x1xi32>
    %cst_8 = arith.constant 0.000000e+00 : f32
    %27 = vector.broadcast %cst_8 : f32 to vector<8x1xf32>
    %28 = arith.select %26, %18, %27 : vector<8x1xi1>, vector<8x1xf32>
    %29 = vector.shape_cast %28 : vector<8x1xf32> to vector<1x8x1xf32>
    %cst_9 = arith.constant dense<0.000000e+00> : vector<1xf32>
    %30 = vector.multi_reduction <add>, %29, %cst_9 [1, 2] : vector<1x8x1xf32> to vector<1xf32>
    %31 = vector.shape_cast %30 : vector<1xf32> to vector<1x1x1xf32>
    %32 = vector.extract %31[0, 0, 0] : f32 from vector<1x1x1xf32>
    %33 = vector.broadcast %32 : f32 to vector<8x128xf32>
    %c0_10 = arith.constant 0 : index
    %c0_11 = arith.constant 0 : index
    %c0_12 = arith.constant 0 : index
    %c0_13 = arith.constant 0 : index
    %34 = vector.load %arg5[%c0_10, %c0_11, %c0_12, %c0_13] : memref<1x1x8x128xf32, #tpu.memory_space<vmem>>, vector<1x1x8x128xf32>
    %35 = vector.shape_cast %34 : vector<1x1x8x128xf32> to vector<8x128xf32>
    %36 = vector.shape_cast %33 : vector<8x128xf32> to vector<1x1x8x128xf32>
    tpu.vector_store %arg5[%c0_10, %c0_11, %c0_12, %c0_13], %36 {strides = array<i32>} : memref<1x1x8x128xf32, #tpu.memory_space<vmem>>, vector<1x1x8x128xf32>,
    return
  }
  func.func @transform_0(%arg0: i32, %arg1: i32, %arg2: memref<2xi32, #tpu.memory_space<smem>>) -> (i32, i32, i32) {
    %c0_i32 = arith.constant 0 : i32
    %c0_i32_0 = arith.constant 0 : i32
    return %arg0, %arg1, %c0_i32 : i32, i32, i32
  }
  func.func @transform_1(%arg0: i32, %arg1: i32, %arg2: memref<2xi32, #tpu.memory_space<smem>>) -> (i32, i32, i32) {
    %c0_i32 = arith.constant 0 : i32
    %c0_i32_0 = arith.constant 0 : i32
    return %arg0, %arg1, %c0_i32 : i32, i32, i32
  }
  func.func @transform_2(%arg0: i32, %arg1: i32, %arg2: memref<2xi32, #tpu.memory_space<smem>>) -> (i32, i32, i32, i32) {
    %c0_i32 = arith.constant 0 : i32
    %c0_i32_0 = arith.constant 0 : i32
    %c0_i32_1 = arith.constant 0 : i32
    return %arg0, %arg1, %c0_i32, %c0_i32_0 : i32, i32, i32, i32
  }
}

</mosaic_0001>

<llo_original>
// kernel: tpu_custom_call.1
$region0: #{tpu_custom_call.1}
  #allocation0 [shape = 'u32[]', space=smem, size = 0x4, offset = 0x4, fixed_abs, tag = 'smem constant byte address 0x4 - core index']
  #allocation1 [shape = 'u32[144,128]{1,0:T(1,128)}', space=vmem, size = 0x12000, scoped, tag = 'internal scratch']
  #allocation2 [shape = 's32[1]{0}', space=sflag, size = 0x4, scoped, tag = 'scoped memory for tpu_custom_call.1']
  #allocation3 [shape = 'u8[512]{0}', space=smem, size = 0x200, scoped, tag = 'prefetched SMEM operand 0']
  %s0 = inlined_call_operand.hbm [shape: s32[2], index: 0, kind: input, shape index: {}]
  %s1 = inlined_call_operand.hbm [shape: f32[2,8,32], index: 1, kind: input, shape index: {}]
  %s2 = inlined_call_operand.hbm [shape: f32[2,8,32], index: 2, kind: input, shape index: {}]
  %s3 = inlined_call_operand.hbm [shape: f32[2,1,8,128], index: 3, kind: output, shape index: {}]
  %s4 = sld [smem:[#allocation0]]
  $region49: #{tpu_custom_call.1} parent=0
    _
  %s6 = ssub.s32 1, %s4
  %s7 = scalar_select 0, %s6, %s4
  %9 = dma.hbm_to_smem %s0, 16, [#allocation3], [#allocation2]
  %10 = dma.done [#allocation2], 16
  %11 = sfence
  $region1: #{tpu_custom_call.1} parent=0
    #allocation4 [shape = 'u8[8192]{0}', space=vmem, size = 0x2000, scoped, tag = 'input window, operand 1']
    #allocation5 [shape = 's32[2]{0}', space=sflag, size = 0x8, scoped, tag = 'scoped memory for tpu_custom_call.1']
    #allocation6 [shape = 's32[2]{0}', space=sflag, size = 0x8, scoped, tag = 'scoped memory for tpu_custom_call.1']
    #allocation7 [shape = 'u8[8192]{0}', space=vmem, size = 0x2000, scoped, tag = 'input window, operand 2']
    #allocation8 [shape = 's32[2]{0}', space=sflag, size = 0x8, scoped, tag = 'scoped memory for tpu_custom_call.1']
    #allocation9 [shape = 'u8[8192]{0}', space=vmem, size = 0x2000, scoped, tag = 'output window, operand 0']
    %12 = vsyncpa [#allocation5], 0
    %s13 = scalar_lea.sflag [#allocation5], 1
    %14 = vsyncpa %s13, 0
    %15 = vsyncpa [#allocation8], 0
    %s16 = scalar_lea.sflag [#allocation8], 1
    %17 = vsyncpa %s16, 0
    %18 = vsyncpa [#allocation6], 0
    %s19 = scalar_lea.sflag [#allocation6], 1
    %20 = vsyncpa %s19, 0
    loop: start=0, step=1, limit=4
    $region2: #{tpu_custom_call.1} parent=1 // loop_pre_header
      _
    $region3: #{tpu_custom_call.1} parent=1 // loop_header
      %s22 = sphi 0, %s26
      %p23 = scmp.ge.s32.totalorder %s22, 4
      %s29 = sphi 0, %s41
      %s30 = sphi 0, %s37
      %s31 = sphi 0, %s29
      %s32 = sphi 0, %s30
      %s33 = sphi 0, %s31
      %s34 = sphi 0, %s32
      %s46 = sphi 0, %s48
      %s49 = sphi 0, %s46
      %s50 = sphi 0, %s49
      %s66 = sphi 0, %s50
      %s74 = sphi 0, %s76
      %s77 = sphi 0, %s74
      %s78 = sphi 0, %s77
      %s94 = sphi 0, %s78
      %s102 = sphi 0, %s104
      %s105 = sphi 0, %s102
      %s106 = sphi 0, %s105
      %s122 = sphi 0, %s106
    $region4: #{tpu_custom_call.1} parent=1 // loop_header_branch
      %25 = sbr.rel (%p23) target = $region8
    $region5: #{tpu_custom_call.1} parent=1 // loop_body
      %s27 = ssub.s32 %s22, 1
      %s28 = ssub.s32 %s22, 2
      %s35 = sadd.s32 1, %s30
      %p36 = scmp.ge.s32.totalorder %s35, 1
      %s37 = scalar_select %p36, 0, %s35
      %s38 = sadd.s32 1, %s29
      %s39 = scalar_select %p36, %s38, %s29
      %p40 = scmp.ge.s32.totalorder %s39, 2
      %s41 = scalar_select %p40, 0, %s39
      %s42 = ssub.s32 %s29, %s41
      %s43 = ssub.s32 %s30, %s37
      %s44 = sor.u32 %s42, %s43
      %p45 = scmp.eq.s32.totalorder %s44, 0
      %s47 = sadd.s32 %s46, 1
      %s48 = scalar_select %p45, %s46, %s47
      %p51 = pneg %p45
      %p52 = scmp.eq.s32.totalorder %s22, 1
      %p53 = por %p51, %p52
      %p54 = scmp.ne.s32.totalorder %s46, %s49
      %p55 = scmp.eq.s32.totalorder %s22, 0
      %p56 = por %p54, %p55
      %p57 = scmp.ne.s32.totalorder %s46, %s49
      %p58 = scmp.eq.s32.totalorder %s27, 1
      %p59 = por %p57, %p58
      %p60 = scmp.ne.s32.totalorder %s49, %s50
      %p61 = scmp.eq.s32.totalorder %s27, 0
      %p62 = por %p60, %p61
      %p63 = scmp.ne.s32.totalorder %s49, %s50
      %p64 = scmp.eq.s32.totalorder %s28, 1
      %p65 = por %p63, %p64
      %p67 = scmp.ne.s32.totalorder %s50, %s66
      %p68 = scmp.eq.s32.totalorder %s28, 0
      %p69 = por %p67, %p68
      %s70 = ssub.s32 %s29, %s41
      %s71 = ssub.s32 %s30, %s37
      %s72 = sor.u32 %s70, %s71
      %p73 = scmp.eq.s32.totalorder %s72, 0
      %s75 = sadd.s32 %s74, 1
      %s76 = scalar_select %p73, %s74, %s75
      %p79 = pneg %p73
      %p80 = scmp.eq.s32.totalorder %s22, 1
      %p81 = por %p79, %p80
      %p82 = scmp.ne.s32.totalorder %s74, %s77
      %p83 = scmp.eq.s32.totalorder %s22, 0
      %p84 = por %p82, %p83
      %p85 = scmp.ne.s32.totalorder %s74, %s77
      %p86 = scmp.eq.s32.totalorder %s27, 1
      %p87 = por %p85, %p86
      %p88 = scmp.ne.s32.totalorder %s77, %s78
      %p89 = scmp.eq.s32.totalorder %s27, 0
      %p90 = por %p88, %p89
      %p91 = scmp.ne.s32.totalorder %s77, %s78
      %p92 = scmp.eq.s32.totalorder %s28, 1
      %p93 = por %p91, %p92
      %p95 = scmp.ne.s32.totalorder %s78, %s94
      %p96 = scmp.eq.s32.totalorder %s28, 0
      %p97 = por %p95, %p96
      %s98 = ssub.s32 %s29, %s41
      %s99 = ssub.s32 %s30, %s37
      %s100 = sor.u32 %s98, %s99
      %p101 = scmp.eq.s32.totalorder %s100, 0
      %s103 = sadd.s32 %s102, 1
      %s104 = scalar_select %p101, %s102, %s103
      %p107 = pneg %p101
      %p108 = scmp.eq.s32.totalorder %s22, 1
      %p109 = por %p107, %p108
      %p110 = scmp.ne.s32.totalorder %s102, %s105
      %p111 = scmp.eq.s32.totalorder %s22, 0
      %p112 = por %p110, %p111
      %p113 = scmp.ne.s32.totalorder %s102, %s105
      %p114 = scmp.eq.s32.totalorder %s27, 1
      %p115 = por %p113, %p114
      %p116 = scmp.ne.s32.totalorder %s105, %s106
      %p117 = scmp.eq.s32.totalorder %s27, 0
      %p118 = por %p116, %p117
      %p119 = scmp.ne.s32.totalorder %s105, %s106
      %p120 = scmp.eq.s32.totalorder %s28, 1
      %p121 = por %p119, %p120
      %p123 = scmp.ne.s32.totalorder %s106, %s122
      %p124 = scmp.eq.s32.totalorder %s28, 0
      %p125 = por %p123, %p124
      %p126 = scmp.le.s32.totalorder 1, %s22
      %p127 = scmp.lt.s32.totalorder %s22, 3
      %p128 = pnand %p126, %p127
      %p129 = pneg %p128
      // Predicated region
      $region9: #{tpu_custom_call.1} parent=5 // pred_check
        _
      $region10: #{tpu_custom_call.1} parent=5 // pred_check_branch
        %131 = sbr.rel (%p128) target = $region12
      $region11: #{tpu_custom_call.1} parent=5 // pred_region
        %s132 = ssub.s32 %s22, 1
      $region12: #{tpu_custom_call.1} parent=5 // pred_fallthru
        _
      %p133 = scmp.lt.s32.totalorder %s22, 2
      // Predicated region
      $region13: #{tpu_custom_call.1} parent=5 // pred_check
        %p134 = pneg %p133
      $region14: #{tpu_custom_call.1} parent=5 // pred_check_branch
        %136 = sbr.rel (%p134) target = $region16
      $region15: #{tpu_custom_call.1} parent=5 // pred_region
        // Predicated region
        $region17: #{tpu_custom_call.1} parent=15 // pred_check
          %p137 = pneg %p56
        $region18: #{tpu_custom_call.1} parent=15 // pred_check_branch
          %139 = sbr.rel (%p137) target = $region20
        $region19: #{tpu_custom_call.1} parent=15 // pred_region
          %s140 = sand.u32 %s46, 1
          %s141 = scalar_lea.sflag [#allocation5], %s140
          %s142 = sand.u32 %s46, 1
          %s143 = smul.addr %s142, 8
          %s144 = scalar_lea.vmem [#allocation4], %s143
          %s146 = ssub.s32 128, 128
          %147 = vsyncadd %s141, %s146
          %s148 = sadd.s32 %s30, %s29
          %s149 = smul.addr %s148, 128
          %s150 = scalar_lea.hbm %s1, %s149
          %s152 = sshll.u32 %s144, 4
          %s153 = int_to_ptr.vmem [resolvable:$true] %s152
          %155 = dma.hbm_to_vmem [thread:$0]  %s150, 128, %s153, %s141
        $region20: #{tpu_custom_call.1} parent=15 // pred_fallthru
          _
        // Predicated region
        $region21: #{tpu_custom_call.1} parent=15 // pred_check
          %p156 = pneg %p84
        $region22: #{tpu_custom_call.1} parent=15 // pred_check_branch
          %158 = sbr.rel (%p156) target = $region24
        $region23: #{tpu_custom_call.1} parent=15 // pred_region
          %s159 = sand.u32 %s74, 1
          %s160 = scalar_lea.sflag [#allocation8], %s159
          %s161 = sand.u32 %s74, 1
          %s162 = smul.addr %s161, 8
          %s163 = scalar_lea.vmem [#allocation7], %s162
          %s165 = ssub.s32 128, 128
          %166 = vsyncadd %s160, %s165
          %s167 = sadd.s32 %s30, %s29
          %s168 = smul.addr %s167, 128
          %s169 = scalar_lea.hbm %s2, %s168
          %s171 = sshll.u32 %s163, 4
          %s172 = int_to_ptr.vmem [resolvable:$true] %s171
          %174 = dma.hbm_to_vmem [thread:$0]  %s169, 128, %s172, %s160
        $region24: #{tpu_custom_call.1} parent=15 // pred_fallthru
          _
      $region16: #{tpu_custom_call.1} parent=5 // pred_fallthru
        _
      %p175 = scmp.le.s32.totalorder 1, %s22
      %p176 = scmp.lt.s32.totalorder %s22, 3
      %p177 = pnand %p175, %p176
      %p178 = pneg %p177
      // Predicated region
      $region25: #{tpu_custom_call.1} parent=5 // pred_check
        _
      $region26: #{tpu_custom_call.1} parent=5 // pred_check_branch
        %180 = sbr.rel (%p177) target = $region28
      $region27: #{tpu_custom_call.1} parent=5 // pred_region
        %s181 = ssub.s32 %s22, 1
        %s182 = sand.u32 %s49, 1
        %s183 = scalar_lea.sflag [#allocation5], %s182
        %s184 = sand.u32 %s49, 1
        %s185 = smul.addr %s184, 8
        %s186 = scalar_lea.vmem [#allocation4], %s185
        // Predicated region
        $region29: #{tpu_custom_call.1} parent=27 // pred_check
          %p187 = pneg %p62
        $region30: #{tpu_custom_call.1} parent=27 // pred_check_branch
          %189 = sbr.rel (%p187) target = $region32
        $region31: #{tpu_custom_call.1} parent=27 // pred_region
          %190 = dma.done %s183, 128
        $region32: #{tpu_custom_call.1} parent=27 // pred_fallthru
          _
        %s191 = sand.u32 %s77, 1
        %s192 = scalar_lea.sflag [#allocation8], %s191
        %s193 = sand.u32 %s77, 1
        %s194 = smul.addr %s193, 8
        %s195 = scalar_lea.vmem [#allocation7], %s194
        // Predicated region
        $region33: #{tpu_custom_call.1} parent=27 // pred_check
          %p196 = pneg %p90
        $region34: #{tpu_custom_call.1} parent=27 // pred_check_branch
          %198 = sbr.rel (%p196) target = $region36
        $region35: #{tpu_custom_call.1} parent=27 // pred_region
          %199 = dma.done %s192, 128
        $region36: #{tpu_custom_call.1} parent=27 // pred_fallthru
          _
        %s200 = sand.u32 %s49, 1
        %s201 = scalar_lea.sflag [#allocation5], %s200
        %s202 = sand.u32 %s49, 1
        %s203 = smul.addr %s202, 8
        %s204 = scalar_lea.vmem [#allocation4], %s203
        %p205 = pneg %p62
        %p206 = pneg %p59
        %s207 = sand.u32 %s77, 1
        %s208 = scalar_lea.sflag [#allocation8], %s207
        %s209 = sand.u32 %s77, 1
        %s210 = smul.addr %s209, 8
        %s211 = scalar_lea.vmem [#allocation7], %s210
        %p212 = pneg %p90
        %p213 = pneg %p87
        %p214 = pneg %p118
        %p215 = pneg %p115
        %s216 = sand.u32 %s105, 1
        %s217 = scalar_lea.sflag [#allocation6], %s216
        %s218 = sand.u32 %s105, 1
        %s219 = smul.addr %s218, 8
        %s220 = scalar_lea.vmem [#allocation9], %s219
        %v221 = vld [vmem:[%s186] sm:$0xff]
        %v222 = vld [vmem:[%s195] sm:$0xff]
        %vm223 = vcmask 261120
        %v224 = vsel %vm223, %v221, -inf
        %225 = vmax.xlane.f32.xlu0 %v224
        %v226 = vpop.xlane.xlu0 %225
        %v227 = vsub.f32 %v221, %v226
        %v228 = vmul.f32 %v227, 1.442695
        %v229 = vpow.pop %v228
        %v230 = vsel %vm223, %v229, 0.0
        %231 = vadd.xlane.f32.xlu0 %v230
        %v232 = vpop.xlane.xlu0 %231
        %v233 = vsel %vm223, %v222, 0.0
        %234 = vadd.xlane.f32.xlu0 %v233
        %v235 = vpop.xlane.xlu0 %234
        %v236 = vmul.f32 %v222, %v227
        %v237 = vsel %vm223, %v236, 0.0
        %238 = vadd.xlane.f32.xlu0 %v237
        %v239 = vpop.xlane.xlu0 %238
        %v240 = vlog2.pop %v232
        %v241 = vmul.f32 %v240, 0.6931472
        %v242 = vmul.f32 %v241, %v235
        %v243 = vsub.f32 %v242, %v239
        %s244 = sld [smem:[#allocation3 + %s31]]
        %s245 = smul.u32 %s32, 8
        %v246 = vlaneseq
        %v247 = vshrl.u32 %v246, 7
        %v248 = vstv %s245
        %v249 = vadd.s32 %v248, %v247
        %v250 = vstv %s244
        %vm251 = vcmp.lt.s32.totalorder %v249, %v250
        %v252 = vsel %vm251, %v243, 0.0
        %vm253 = vcmask 7168
        %v254 = vsel %vm253, %v252, 0.0
        %255 = vadd.xlane.f32.xlu0 %v254
        %v256 = vpop.xlane.xlu0 %255
        %v257 = vrot.slane %v256, 4
        %v258 = vadd.f32 %v256, %v257
        %v259 = vrot.slane %v258, 2
        %v260 = vadd.f32 %v258, %v259
        %v261 = vrot.slane %v260, 1
        %v262 = vadd.f32 %v260, %v261
        %s263 = vtos %v262
        %v264 = vstv %s263
        %265 = vst [vmem:[%s220] sm:$0xff] %v264
        %s266 = sand.u32 %s105, 1
        %s267 = scalar_lea.sflag [#allocation6], %s266
        %s268 = sand.u32 %s105, 1
        %s269 = smul.addr %s268, 8
        %s270 = scalar_lea.vmem [#allocation9], %s269
        // Predicated region
        $region37: #{tpu_custom_call.1} parent=27 // pred_check
          %p271 = pneg %p115
        $region38: #{tpu_custom_call.1} parent=27 // pred_check_branch
          %273 = sbr.rel (%p271) target = $region40
        $region39: #{tpu_custom_call.1} parent=27 // pred_region
          %s275 = ssub.s32 128, 128
          %276 = vsyncadd %s267, %s275
          %s277 = sadd.s32 %s32, %s31
          %s278 = smul.addr %s277, 128
          %s279 = scalar_lea.hbm %s3, %s278
          %s281 = sshll.u32 %s270, 4
          %s282 = int_to_ptr.vmem [resolvable:$true] %s281
          %284 = dma.vmem_to_hbm [thread:$0]  %s282, 128, %s279, %s267
        $region40: #{tpu_custom_call.1} parent=27 // pred_fallthru
          _
      $region28: #{tpu_custom_call.1} parent=5 // pred_fallthru
        _
      %p285 = scmp.le.s32.totalorder 2, %s22
      // Predicated region
      $region41: #{tpu_custom_call.1} parent=5 // pred_check
        %p286 = pneg %p285
      $region42: #{tpu_custom_call.1} parent=5 // pred_check_branch
        %288 = sbr.rel (%p286) target = $region44
      $region43: #{tpu_custom_call.1} parent=5 // pred_region
        %s289 = ssub.s32 %s22, 2
        // Predicated region
        $region45: #{tpu_custom_call.1} parent=43 // pred_check
          %p290 = pneg %p121
        $region46: #{tpu_custom_call.1} parent=43 // pred_check_branch
          %292 = sbr.rel (%p290) target = $region48
        $region47: #{tpu_custom_call.1} parent=43 // pred_region
          %s293 = sand.u32 %s106, 1
          %s294 = scalar_lea.sflag [#allocation6], %s293
          %s295 = sand.u32 %s106, 1
          %s296 = smul.addr %s295, 8
          %s297 = scalar_lea.vmem [#allocation9], %s296
          %298 = dma.done %s294, 128
        $region48: #{tpu_custom_call.1} parent=43 // pred_fallthru
          _
      $region44: #{tpu_custom_call.1} parent=5 // pred_fallthru
        _
    $region6: #{tpu_custom_call.1} parent=1 // loop_footer
      %s26 = sadd.s32 1, %s22
    $region7: #{tpu_custom_call.1} parent=1 // loop_footer_branch
      %21 = sbr.rel target = $region3
    $region8: #{tpu_custom_call.1} parent=1 // loop_exit
      _
    %299 = vsyncpa [#allocation5], 1
    %s300 = scalar_lea.sflag [#allocation5], 1
    %301 = vsyncpa %s300, 1
    %302 = vsyncpa [#allocation8], 1
    %s303 = scalar_lea.sflag [#allocation8], 1
    %304 = vsyncpa %s303, 1
    %305 = vsyncpa [#allocation6], 1
    %s306 = scalar_lea.sflag [#allocation6], 1
    %307 = vsyncpa %s306, 1

</llo_original>
